<compile_context>
chip_gen: v6e
topology: v6e:2x2x1
jax: 0.10.0
libtpu: 0.0.40
codegen_flags: <defaults>
</compile_context>

<pallas_src>
import functools

import jax
import jax.numpy as jnp
from jax.experimental import pallas as pl
from jax.experimental.pallas import tpu as pltpu


def _round_up(x, m):
  return ((x + m - 1) // m) * m


# ---------------------------------------------------------------------------
# Pass 0: edge transform (small, grid-less).  Output bf16 so the big H @ t_edge
# matmul in pass 1 runs bf16 x bf16 on the MXU with f32 accumulation.  The
# weight/bias are pre-augmented so the last output column is exactly 1.0.
# ---------------------------------------------------------------------------
def _edge_transform_kernel(e_ref, we_ref, be_ref, o_ref):
  te = jnp.dot(e_ref[...], we_ref[...],
               preferred_element_type=jnp.float32) + be_ref[...]
  o_ref[...] = te.astype(o_ref.dtype)


# ---------------------------------------------------------------------------
# Pass 1: per-row-tile fused attention + projection (+ min/max, + optional norm).
# ---------------------------------------------------------------------------
def _edge_to_node_attention_kernel(
    node_ref, inc_ref, tedge_ref,
    wn_ref, bn_ref, wa_ref, ba_ref, wo_ref, bo_ref,
    out_ref, min_ref, max_ref,
    *, n_valid, out_dim, fuse_norm):
  x = node_ref[...]                                # (tile_n, node_dim) f32
  h = inc_ref[...].astype(jnp.bfloat16)            # int8 0/1 -> bf16 (exact)
  te = tedge_ref[...]                              # (E, hidden+1) bf16, last col == 1

  # node_transform (aug column of Wn/bn is zero -> t_node[:, -1] == 0).
  t_node = jnp.dot(x, wn_ref[...], preferred_element_type=jnp.float32) + bn_ref[...]

  # H @ [t_edge | 1]: last column of the MXU result is the node degree (row-sum of H),
  # so no materialized f32 cast of H and no length-E reduce on the XLU.
  agg = jnp.dot(h, te, preferred_element_type=jnp.float32)     # (tile_n, hidden+1)
  deg = agg[:, -1:]                                            # degree from the MXU
  agg = agg * pl.reciprocal(deg + 1e-8, approx=True)           # EUP slot

  # attention score: Linear(hidden -> 1) == sum(att_in * wa_row) + ba
  # (wa_aug last element is 0, so the augmented column never contributes).
  att_in = t_node + agg
  scores = jnp.sum(att_in * wa_ref[...], axis=-1, keepdims=True) + ba_ref[0, 0]
  scores = jnp.where(scores > 0, scores, 0.2 * scores)          # LeakyReLU(0.2)
  coeffs = pl.reciprocal(1.0 + jnp.exp(-scores), approx=True)   # sigmoid

  # expand_output (Wo_aug row `hidden` is zero -> augmented column dropped).
  upd = coeffs * agg + t_node
  out = jnp.dot(upd, wo_ref[...], preferred_element_type=jnp.float32) + bo_ref[...]

  cols = jax.lax.broadcasted_iota(jnp.int32, out.shape, 1)
  col_valid = cols < out_dim

  if fuse_norm:
    # grid_n == 1: the tile min/max IS the global min/max -> normalize in place,
    # skipping the separate pass-2 kernel and its HBM round trip.
    rows = jax.lax.broadcasted_iota(jnp.int32, out.shape, 0)
    valid = (rows < n_valid) & col_valid
    mn = jnp.min(jnp.where(valid, out, jnp.inf))
    mx = jnp.max(jnp.where(valid, out, -jnp.inf))
    inv = 1.0 / (mx - mn + 1e-12)
    out_ref[...] = ((out - mn) * inv).astype(out_ref.dtype)
    min_ref[...] = jnp.full(min_ref.shape, mn, dtype=min_ref.dtype)
    max_ref[...] = jnp.full(max_ref.shape, mx, dtype=max_ref.dtype)
  else:
    out_ref[...] = out.astype(out_ref.dtype)       # bf16 raw output (lane-dense)
    last = pl.num_programs(0) - 1

    # Interior tiles have no padded rows: mask columns only (cheaper epilogue).
    @pl.when(pl.program_id(0) < last)
    def _():
      mn = jnp.min(jnp.where(col_valid, out, jnp.inf))
      mx = jnp.max(jnp.where(col_valid, out, -jnp.inf))
      min_ref[...] = jnp.full(min_ref.shape, mn, dtype=min_ref.dtype)
      max_ref[...] = jnp.full(max_ref.shape, mx, dtype=max_ref.dtype)

    # Only the last tile may contain padded rows.
    @pl.when(pl.program_id(0) == last)
    def _():
      rows = (jax.lax.broadcasted_iota(jnp.int32, out.shape, 0)
              + pl.program_id(0) * out.shape[0])
      valid = (rows < n_valid) & col_valid
      mn = jnp.min(jnp.where(valid, out, jnp.inf))
      mx = jnp.max(jnp.where(valid, out, -jnp.inf))
      min_ref[...] = jnp.full(min_ref.shape, mn, dtype=min_ref.dtype)
      max_ref[...] = jnp.full(max_ref.shape, mx, dtype=max_ref.dtype)


# ---------------------------------------------------------------------------
# Pass 2: global min-max normalization (only when grid_n > 1).
# ---------------------------------------------------------------------------
def _min_max_normalize_kernel(mn_ref, mx_ref, x_ref, o_ref):
  # TODO(synk): utils.min_max_normalize_cuda assumed to be whole-tensor (x-min)/(max-min);
  # eps added to guard a constant tensor (original had no guard).
  mn = mn_ref[0, 0]
  mx = mx_ref[0, 0]
  inv = 1.0 / (mx - mn + 1e-12)
  o_ref[...] = (x_ref[...].astype(jnp.float32) - mn) * inv


# ---------------------------------------------------------------------------
# Per-generation sizing (VMEM budget -> tile_n, vmem_limit).
# ---------------------------------------------------------------------------
def _vmem_capacity_bytes():
  try:
    return int(pltpu.get_tpu_info().vmem_capacity_bytes)
  except Exception:
    return 64 * 1024 * 1024          # conservative fallback (v7x per-TC size)


def _pick_config(n, e_num, node_dim, hidden, lane):
  cap = _vmem_capacity_bytes()
  if cap >= 96 * 1024 * 1024:        # v5e / v6e: 128 MiB physical VMEM
    vmem_limit = 100 * 1024 * 1024
    is_small_vmem = False
  else:                              # v7x: 64 MiB per TensorCore
    vmem_limit = 40 * 1024 * 1024
    is_small_vmem = True
  budget = int(vmem_limit * 0.75)    # headroom for compiler-internal scratch

  # Resident (single-buffered) operands: t_edge_aug + weights (lane-padded in VMEM).
  resident = e_num * 128 * 2 + (node_dim + hidden + 8) * 128 * 4
  # Per-row streamed / temp bytes:
  per_row = (2 * e_num               # int8 H, double-buffered
             + 2 * e_num             # in-kernel bf16-widened H copy (MXU operand)
             + 2 * node_dim * 4      # f32 node tile, double-buffered
             + 2 * lane * 2          # bf16 raw output, double-buffered
             + 8 * 128 * 4)          # f32 epilogue temps (t_node/agg/out/...)
  tile = max(budget - resident, 0) // per_row
  tile = max(256, min(1024, (tile // 256) * 256))

  n8 = _round_up(n, 8)
  if n8 <= tile:
    if is_small_vmem and n8 >= 512:
      # Ensure grid_n >= 2 so ("parallel",) actually uses both v7x TensorCores.
      tile = _round_up((n8 + 1) // 2, 256)
    else:
      tile = n8                      # single tile: normalization fused in-kernel
  return tile, vmem_limit


# ---------------------------------------------------------------------------
# Wrapper
# ---------------------------------------------------------------------------
@functools.partial(jax.jit, static_argnames=("tile_n", "lane", "vmem_limit"))
def _edge_to_node_attention_impl(node_features, incidence_matrix, edge_features,
                                 params, *, tile_n, lane, vmem_limit):
  n, node_dim = node_features.shape
  e_num, edge_dim = edge_features.shape
  hidden = params["wn"].shape[1]
  out_dim = params["wo"].shape[1]
  f32 = jnp.float32
  vmem = pltpu.MemorySpace.VMEM
  smem = pltpu.MemorySpace.SMEM

  # ---- augment weights: extra column carries the "ones" (degree) channel ----
  we_aug = jnp.concatenate([params["we"], jnp.zeros((edge_dim, 1), f32)], axis=1)
  be_aug = jnp.concatenate([params["be"], jnp.ones((1, 1), f32)], axis=1)
  wn_aug = jnp.concatenate([params["wn"], jnp.zeros((node_dim, 1), f32)], axis=1)
  bn_aug = jnp.concatenate([params["bn"], jnp.zeros((1, 1), f32)], axis=1)
  wa_aug = jnp.concatenate([params["wa"], jnp.zeros((1, 1), f32)], axis=1)
  wo_aug = jnp.zeros((hidden + 1, lane), f32).at[:hidden, :out_dim].set(params["wo"])
  bo_p = jnp.zeros((1, lane), f32).at[:, :out_dim].set(params["bo"])

  # ---- pass 0: edge transform, computed once (hoisted out of the N loop) ----
  t_edge = pl.pallas_call(
      _edge_transform_kernel,
      out_shape=jax.ShapeDtypeStruct((e_num, hidden + 1), jnp.bfloat16),
      in_specs=[pl.BlockSpec(memory_space=vmem)] * 3,
      out_specs=pl.BlockSpec(memory_space=vmem),
      compiler_params=pltpu.CompilerParams(vmem_limit_bytes=vmem_limit),
  )(edge_features, we_aug, be_aug)

  # ---- row tiling over N (padded rows are masked out of min/max) ----
  n_pad = _round_up(n, tile_n)
  grid_n = n_pad // tile_n
  fuse_norm = grid_n == 1

  x_p = jnp.zeros((n_pad, node_dim), f32).at[:n].set(node_features.astype(f32))
  # H stored as int8 (0/1 exact) -> half the HBM bytes of the dominant stream.
  h_p = jnp.zeros((n_pad, e_num), jnp.int8).at[:n].set(
      incidence_matrix.astype(jnp.int8))

  out_dtype = f32 if fuse_norm else jnp.bfloat16
  kernel = functools.partial(_edge_to_node_attention_kernel,
                             n_valid=n, out_dim=out_dim, fuse_norm=fuse_norm)
  resident = functools.partial(pl.BlockSpec, pipeline_mode=pl.Buffered(1))

  out_main, tile_mins, tile_maxs = pl.pallas_call(
      kernel,
      grid=(grid_n,),
      in_specs=[
          pl.BlockSpec((tile_n, node_dim), lambda i: (i, 0)),       # node tile (streamed)
          pl.BlockSpec((tile_n, e_num), lambda i: (i, 0)),          # H tile, int8 (streamed)
          resident((e_num, hidden + 1), lambda i: (0, 0)),          # t_edge_aug (resident, 1-buf)
          resident((node_dim, hidden + 1), lambda i: (0, 0)),       # Wn_aug
          resident((1, hidden + 1), lambda i: (0, 0)),              # bn_aug
          resident((1, hidden + 1), lambda i: (0, 0)),              # wa_aug (row form)
          pl.BlockSpec(memory_space=smem),                          # ba scalar in SMEM
          resident((hidden + 1, lane), lambda i: (0, 0)),           # Wo_aug (lane-dense)
          resident((1, lane), lambda i: (0, 0)),                    # bo padded
      ],
      out_specs=[
          pl.BlockSpec((tile_n, lane), lambda i: (i, 0)),           # raw / normalized output
          pl.BlockSpec((8, 128), lambda i: (i, 0)),                 # per-tile min
          pl.BlockSpec((8, 128), lambda i: (i, 0)),                 # per-tile max
      ],
      out_shape=[
          jax.ShapeDtypeStruct((n_pad, lane), out_dtype),
          jax.ShapeDtypeStruct((grid_n * 8, 128), jnp.float32),
          jax.ShapeDtypeStruct((grid_n * 8, 128), jnp.float32),
      ],
      compiler_params=pltpu.CompilerParams(
          dimension_semantics=("parallel",),      # shards N tiles across v7x's 2 TCs
          vmem_limit_bytes=vmem_limit),
  )(x_p, h_p, t_edge, wn_aug, bn_aug, wa_aug, params["ba"], wo_aug, bo_p)

  if fuse_norm:
    return out_main[:n, :out_dim]

  g_min = jnp.min(tile_mins).reshape(1, 1)
  g_max = jnp.max(tile_maxs).reshape(1, 1)

  # ---- pass 2: cheap elementwise normalization sweep (bf16 in, f32 out) ----
  out_norm = pl.pallas_call(
      _min_max_normalize_kernel,
      grid=(grid_n,),
      in_specs=[
          pl.BlockSpec(memory_space=smem),                          # global min
          pl.BlockSpec(memory_space=smem),                          # global max
          pl.BlockSpec((tile_n, lane), lambda i: (i, 0)),
      ],
      out_specs=pl.BlockSpec((tile_n, lane), lambda i: (i, 0)),
      out_shape=jax.ShapeDtypeStruct((n_pad, lane), jnp.float32),
      compiler_params=pltpu.CompilerParams(
          dimension_semantics=("parallel",),
          vmem_limit_bytes=vmem_limit),
  )(g_min, g_max, out_main)

  return out_norm[:n, :out_dim]


def edge_to_node_attention(node_features, incidence_matrix, edge_features, params):
  n, node_dim = node_features.shape
  e_num, _ = edge_features.shape
  hidden = params["wn"].shape[1]
  out_dim = params["wo"].shape[1]
  lane = _round_up(max(out_dim, 128), 128)         # lane-dense output stores
  tile_n, vmem_limit = _pick_config(n, e_num, node_dim, hidden, lane)
  return _edge_to_node_attention_impl(
      node_features, incidence_matrix, edge_features, params,
      tile_n=tile_n, lane=lane, vmem_limit=vmem_limit)


# ---------------------------------------------------------------------------
# Reference (pure jnp, f32) for a correctness sanity check.
# ---------------------------------------------------------------------------
def _reference(node_features, incidence, edge_features, p):
  t_node = node_features @ p["wn"] + p["bn"]
  t_edge = edge_features @ p["we"] + p["be"]
  agg = (incidence @ t_edge) / (incidence.sum(axis=1, keepdims=True) + 1e-8)
  att = t_node + agg
  s = att @ p["wa"].T + p["ba"]
  s = jnp.where(s > 0, s, 0.2 * s)
  c = jax.nn.sigmoid(s)
  out = (c * agg + t_node) @ p["wo"] + p["bo"]
  mn, mx = jnp.min(out), jnp.max(out)
  return (out - mn) / (mx - mn + 1e-12)


def _linear_init(kw, kb, fan_in, fan_out):
  # Mirrors PyTorch nn.Linear default init (uniform +/- 1/sqrt(fan_in)), deterministic.
  bound = 1.0 / float(fan_in) ** 0.5
  w = jax.random.uniform(kw, (fan_in, fan_out), jnp.float32, -bound, bound)
  b = jax.random.uniform(kb, (1, fan_out), jnp.float32, -bound, bound)
  return w, b


if __name__ == "__main__":
  key = jax.random.PRNGKey(0)
  N, E = 64, 32
  node_dim, edge_dim, hidden_dim, output_dim = 16, 8, 32, 16
  ks = jax.random.split(key, 11)

  node_features = jax.random.normal(ks[0], (N, node_dim), jnp.float32)
  incidence = (jax.random.uniform(ks[1], (N, E)) < 0.3).astype(jnp.float32)
  edge_features = jax.random.normal(ks[2], (E, edge_dim), jnp.float32)

  wn, bn = _linear_init(ks[3], ks[4], node_dim, hidden_dim)       # node_transform
  we, be = _linear_init(ks[5], ks[6], edge_dim, hidden_dim)       # edge_transform
  wa_col, ba = _linear_init(ks[7], ks[8], hidden_dim, 1)          # attention_weight
  wa = wa_col.T                                                   # stored as (1, hidden)
  wo, bo = _linear_init(ks[9], ks[10], hidden_dim, output_dim)    # expand_output
  # NOTE: nn.BatchNorm1d is defined in __init__ but never used in forward() -> omitted.

  params = dict(wn=wn, bn=bn, we=we, be=be, wa=wa, ba=ba, wo=wo, bo=bo)

  out = edge_to_node_attention(node_features, incidence, edge_features, params)
  out = jax.block_until_ready(out)
  assert out.shape == (N, output_dim)
  assert bool(jnp.isfinite(out).all())

  ref = _reference(node_features, incidence, edge_features, params)
  max_err = float(jnp.max(jnp.abs(out - ref)))
  assert max_err < 0.08, f"mismatch vs reference: {max_err}"
  print("KERNEL_OK")
</pallas_src>

<mosaic_0001>
module attributes {stable_mosaic.version = 11 : i64} {
  func.func @_edge_transform_kernel(%arg0: memref<32x8xf32, #tpu.memory_space<vmem>>, %arg1: memref<8x33xf32, #tpu.memory_space<vmem>>, %arg2: memref<1x33xf32, #tpu.memory_space<vmem>>, %arg3: memref<32x33xbf16, #tpu.memory_space<vmem>>) attributes {dimension_semantics = [], scalar_prefetch = 0 : i64, scratch_operands = 0 : i64, tpu.core_type = #tpu.core_type<tc>} {
    %c0 = arith.constant 0 : index
    %c0_0 = arith.constant 0 : index
    %0 = vector.load %arg0[%c0, %c0_0] : memref<32x8xf32, #tpu.memory_space<vmem>>, vector<32x8xf32>
    %c0_1 = arith.constant 0 : index
    %c0_2 = arith.constant 0 : index
    %1 = vector.load %arg1[%c0_1, %c0_2] : memref<8x33xf32, #tpu.memory_space<vmem>>, vector<8x33xf32>
    %cst = arith.constant dense<0.000000e+00> : vector<32x33xf32>
    %2 = tpu.matmul %0, %1, %cst {dimension_numbers = #tpu.dot_dimension_numbers<[1], [0], [0], [1], [0, 0, 1, 1], [], []>} : vector<32x8xf32>, vector<8x33xf32>, vector<32x33xf32> -> vector<32x33xf32>
    %c0_3 = arith.constant 0 : index
    %c0_4 = arith.constant 0 : index
    %3 = vector.load %arg2[%c0_3, %c0_4] : memref<1x33xf32, #tpu.memory_space<vmem>>, vector<1x33xf32>
    %4 = vector.broadcast %3 : vector<1x33xf32> to vector<32x33xf32>
    %5 = arith.addf %2, %4 : vector<32x33xf32>
    %6 = arith.truncf %5 : vector<32x33xf32> to vector<32x33xbf16>
    %c0_5 = arith.constant 0 : index
    %c0_6 = arith.constant 0 : index
    %7 = vector.load %arg3[%c0_5, %c0_6] : memref<32x33xbf16, #tpu.memory_space<vmem>>, vector<32x33xbf16>
    tpu.vector_store %arg3[%c0_5, %c0_6], %6 {strides = array<i32>} : memref<32x33xbf16, #tpu.memory_space<vmem>>, vector<32x33xbf16>,
    return
  }
}

module attributes {stable_mosaic.version = 11 : i64} {
  func.func @_edge_to_node_attention_kernel(%arg0: i32, %arg1: memref<64x16xf32, #tpu.memory_space<vmem>>, %arg2: memref<64x32xi8, #tpu.memory_space<vmem>>, %arg3: memref<32x33xbf16, #tpu.memory_space<vmem>>, %arg4: memref<16x33xf32, #tpu.memory_space<vmem>>, %arg5: memref<1x33xf32, #tpu.memory_space<vmem>>, %arg6: memref<1x33xf32, #tpu.memory_space<vmem>>, %arg7: memref<1x1xf32, #tpu.memory_space<smem>>, %arg8: memref<33x128xf32, #tpu.memory_space<vmem>>, %arg9: memref<1x128xf32, #tpu.memory_space<vmem>>, %arg10: memref<64x128xf32, #tpu.memory_space<vmem>>, %arg11: memref<8x128xf32, #tpu.memory_space<vmem>>, %arg12: memref<8x128xf32, #tpu.memory_space<vmem>>) attributes {dimension_semantics = [#tpu.dimension_semantics<parallel>], iteration_bounds = array<i64: 1>, scalar_prefetch = 0 : i64, scratch_operands = 0 : i64, tpu.core_type = #tpu.core_type<tc>, window_params = [{transform_indices = @transform_0, window_bounds = array<i64: 64, 16>}, {transform_indices = @transform_1, window_bounds = array<i64: 64, 32>}, {pipeline_mode = #tpu.pipeline_mode<synchronous>, transform_indices = @transform_2, window_bounds = array<i64: 32, 33>}, {pipeline_mode = #tpu.pipeline_mode<synchronous>, transform_indices = @transform_3, window_bounds = array<i64: 16, 33>}, {pipeline_mode = #tpu.pipeline_mode<synchronous>, transform_indices = @transform_4, window_bounds = array<i64: 1, 33>}, {pipeline_mode = #tpu.pipeline_mode<synchronous>, transform_indices = @transform_5, window_bounds = array<i64: 1, 33>}, {transform_indices = @transform_6, window_bounds = array<i64: 1, 1>}, {pipeline_mode = #tpu.pipeline_mode<synchronous>, transform_indices = @transform_7, window_bounds = array<i64: 33, 128>}, {pipeline_mode = #tpu.pipeline_mode<synchronous>, transform_indices = @transform_8, window_bounds = array<i64: 1, 128>}, {transform_indices = @transform_9, window_bounds = array<i64: 64, 128>}, {transform_indices = @transform_10, window_bounds = array<i64: 8, 128>}, {transform_indices = @transform_11, window_bounds = array<i64: 8, 128>}]} {
    %c0 = arith.constant 0 : index
    %c0_0 = arith.constant 0 : index
    %0 = vector.load %arg1[%c0, %c0_0] : memref<64x16xf32, #tpu.memory_space<vmem>>, vector<64x16xf32>
    %c0_1 = arith.constant 0 : index
    %c0_2 = arith.constant 0 : index
    %1 = vector.load %arg2[%c0_1, %c0_2] : memref<64x32xi8, #tpu.memory_space<vmem>>, vector<64x32xi8>
    %2 = arith.sitofp %1 : vector<64x32xi8> to vector<64x32xbf16>
    %c0_3 = arith.constant 0 : index
    %c0_4 = arith.constant 0 : index
    %3 = vector.load %arg3[%c0_3, %c0_4] : memref<32x33xbf16, #tpu.memory_space<vmem>>, vector<32x33xbf16>
    %c0_5 = arith.constant 0 : index
    %c0_6 = arith.constant 0 : index
    %4 = vector.load %arg4[%c0_5, %c0_6] : memref<16x33xf32, #tpu.memory_space<vmem>>, vector<16x33xf32>
    %cst = arith.constant dense<0.000000e+00> : vector<64x33xf32>
    %5 = tpu.matmul %0, %4, %cst {dimension_numbers = #tpu.dot_dimension_numbers<[1], [0], [0], [1], [0, 0, 1, 1], [], []>} : vector<64x16xf32>, vector<16x33xf32>, vector<64x33xf32> -> vector<64x33xf32>
    %c0_7 = arith.constant 0 : index
    %c0_8 = arith.constant 0 : index
    %6 = vector.load %arg5[%c0_7, %c0_8] : memref<1x33xf32, #tpu.memory_space<vmem>>, vector<1x33xf32>
    %7 = vector.broadcast %6 : vector<1x33xf32> to vector<64x33xf32>
    %8 = arith.addf %5, %7 : vector<64x33xf32>
    %cst_9 = arith.constant dense<0.000000e+00> : vector<64x33xf32>
    %9 = tpu.matmul %2, %3, %cst_9 {dimension_numbers = #tpu.dot_dimension_numbers<[1], [0], [0], [1], [0, 0, 1, 1], [], []>} : vector<64x32xbf16>, vector<32x33xbf16>, vector<64x33xf32> -> vector<64x33xf32>
    %10 = vector.extract_strided_slice %9 {offsets = [0, 32], sizes = [64, 1], strides = [1, 1]} : vector<64x33xf32> to vector<64x1xf32>
    %cst_10 = arith.constant 9.99999993E-9 : f32
    %11 = vector.broadcast %cst_10 : f32 to vector<64x1xf32>
    %12 = arith.addf %10, %11 : vector<64x1xf32>
    %13 = tpu.reciprocal %12 {approx = true} : vector<64x1xf32> -> vector<64x1xf32>
    %14 = vector.broadcast %13 : vector<64x1xf32> to vector<64x33xf32>
    %15 = arith.mulf %9, %14 : vector<64x33xf32>
    %16 = arith.addf %8, %15 : vector<64x33xf32>
    %c0_11 = arith.constant 0 : index
    %c0_12 = arith.constant 0 : index
    %17 = vector.load %arg6[%c0_11, %c0_12] : memref<1x33xf32, #tpu.memory_space<vmem>>, vector<1x33xf32>
    %18 = vector.broadcast %17 : vector<1x33xf32> to vector<64x33xf32>
    %19 = arith.mulf %16, %18 : vector<64x33xf32>
    %cst_13 = arith.constant dense<0.000000e+00> : vector<64xf32>
    %20 = vector.multi_reduction <add>, %19, %cst_13 [1] : vector<64x33xf32> to vector<64xf32>
    %21 = vector.shape_cast %20 : vector<64xf32> to vector<64x1xf32>
    %c0_14 = arith.constant 0 : index
    %c0_15 = arith.constant 0 : index
    %22 = memref.load %arg7[%c0_14, %c0_15] : memref<1x1xf32, #tpu.memory_space<smem>>
    %23 = vector.broadcast %22 : f32 to vector<64x1xf32>
    %24 = arith.addf %21, %23 : vector<64x1xf32>
    %cst_16 = arith.constant 0.000000e+00 : f32
    %25 = vector.broadcast %cst_16 : f32 to vector<64x1xf32>
    %26 = arith.cmpf ogt, %24, %25 : vector<64x1xf32>
    %cst_17 = arith.constant 2.000000e-01 : f32
    %27 = vector.broadcast %cst_17 : f32 to vector<64x1xf32>
    %28 = arith.mulf %27, %24 : vector<64x1xf32>
    %29 = arith.select %26, %24, %28 : vector<64x1xi1>, vector<64x1xf32>
    %cst_18 = arith.constant 0.000000e+00 : f32
    %30 = vector.broadcast %cst_18 : f32 to vector<64x1xf32>
    %31 = arith.subf %30, %29 : vector<64x1xf32>
    %32 = math.exp %31 : vector<64x1xf32>
    %cst_19 = arith.constant 1.000000e+00 : f32
    %33 = vector.broadcast %cst_19 : f32 to vector<64x1xf32>
    %34 = arith.addf %33, %32 : vector<64x1xf32>
    %35 = tpu.reciprocal %34 {approx = true} : vector<64x1xf32> -> vector<64x1xf32>
    %36 = vector.broadcast %35 : vector<64x1xf32> to vector<64x33xf32>
    %37 = arith.mulf %36, %15 : vector<64x33xf32>
    %38 = arith.addf %37, %8 : vector<64x33xf32>
    %c0_20 = arith.constant 0 : index
    %c0_21 = arith.constant 0 : index
    %39 = vector.load %arg8[%c0_20, %c0_21] : memref<33x128xf32, #tpu.memory_space<vmem>>, vector<33x128xf32>
    %cst_22 = arith.constant dense<0.000000e+00> : vector<64x128xf32>
    %40 = tpu.matmul %38, %39, %cst_22 {dimension_numbers = #tpu.dot_dimension_numbers<[1], [0], [0], [1], [0, 0, 1, 1], [], []>} : vector<64x33xf32>, vector<33x128xf32>, vector<64x128xf32> -> vector<64x128xf32>
    %c0_23 = arith.constant 0 : index
    %c0_24 = arith.constant 0 : index
    %41 = vector.load %arg9[%c0_23, %c0_24] : memref<1x128xf32, #tpu.memory_space<vmem>>, vector<1x128xf32>
    %42 = vector.broadcast %41 : vector<1x128xf32> to vector<64x128xf32>
    %43 = arith.addf %40, %42 : vector<64x128xf32>
    %44 = tpu.iota {dimensions = array<i32: 1>} : vector<64x128xi32>
    %c16_i32 = arith.constant 16 : i32
    %45 = vector.broadcast %c16_i32 : i32 to vector<64x128xi32>
    %46 = arith.cmpi slt, %44, %45 : vector<64x128xi32>
    %47 = tpu.iota {dimensions = array<i32: 0>} : vector<64x128xi32>
    %c64_i32 = arith.constant 64 : i32
    %48 = vector.broadcast %c64_i32 : i32 to vector<64x128xi32>
    %49 = arith.cmpi slt, %47, %48 : vector<64x128xi32>
    %50 = arith.andi %49, %46 : vector<64x128xi1>
    %cst_25 = arith.constant 0x7F800000 : f32
    %51 = vector.broadcast %cst_25 : f32 to vector<64x128xf32>
    %52 = arith.select %50, %43, %51 : vector<64x128xi1>, vector<64x128xf32>
    %53 = vector.shape_cast %52 : vector<64x128xf32> to vector<1x64x128xf32>
    %cst_26 = arith.constant dense<0x7F800000> : vector<1xf32>
    %54 = vector.multi_reduction <minimumf>, %53, %cst_26 [1, 2] : vector<1x64x128xf32> to vector<1xf32>
    %55 = vector.shape_cast %54 : vector<1xf32> to vector<1x1x1xf32>
    %56 = vector.extract %55[0, 0, 0] : f32 from vector<1x1x1xf32>
    %cst_27 = arith.constant 0xFF800000 : f32
    %57 = vector.broadcast %cst_27 : f32 to vector<64x128xf32>
    %58 = arith.select %50, %43, %57 : vector<64x128xi1>, vector<64x128xf32>
    %59 = vector.shape_cast %58 : vector<64x128xf32> to vector<1x64x128xf32>
    %cst_28 = arith.constant dense<0xFF800000> : vector<1xf32>
    %60 = vector.multi_reduction <maximumf>, %59, %cst_28 [1, 2] : vector<1x64x128xf32> to vector<1xf32>
    %61 = vector.shape_cast %60 : vector<1xf32> to vector<1x1x1xf32>
    %62 = vector.extract %61[0, 0, 0] : f32 from vector<1x1x1xf32>
    %63 = arith.subf %62, %56 : f32
    %cst_29 = arith.constant 9.99999996E-13 : f32
    %64 = arith.addf %63, %cst_29 : f32
    %cst_30 = arith.constant 1.000000e+00 : f32
    %65 = arith.divf %cst_30, %64 : f32
    %66 = vector.broadcast %56 : f32 to vector<64x128xf32>
    %67 = arith.subf %43, %66 : vector<64x128xf32>
    %68 = vector.broadcast %65 : f32 to vector<64x128xf32>
    %69 = arith.mulf %67, %68 : vector<64x128xf32>
    %c0_31 = arith.constant 0 : index
    %c0_32 = arith.constant 0 : index
    %70 = vector.load %arg10[%c0_31, %c0_32] : memref<64x128xf32, #tpu.memory_space<vmem>>, vector<64x128xf32>
    tpu.vector_store %arg10[%c0_31, %c0_32], %69 {strides = array<i32>} : memref<64x128xf32, #tpu.memory_space<vmem>>, vector<64x128xf32>,
    %71 = vector.broadcast %56 : f32 to vector<8x128xf32>
    %c0_33 = arith.constant 0 : index
    %c0_34 = arith.constant 0 : index
    %72 = vector.load %arg11[%c0_33, %c0_34] : memref<8x128xf32, #tpu.memory_space<vmem>>, vector<8x128xf32>
    tpu.vector_store %arg11[%c0_33, %c0_34], %71 {strides = array<i32>} : memref<8x128xf32, #tpu.memory_space<vmem>>, vector<8x128xf32>,
    %73 = vector.broadcast %62 : f32 to vector<8x128xf32>
    %c0_35 = arith.constant 0 : index
    %c0_36 = arith.constant 0 : index
    %74 = vector.load %arg12[%c0_35, %c0_36] : memref<8x128xf32, #tpu.memory_space<vmem>>, vector<8x128xf32>
    tpu.vector_store %arg12[%c0_35, %c0_36], %73 {strides = array<i32>} : memref<8x128xf32, #tpu.memory_space<vmem>>, vector<8x128xf32>,
    return
  }
  func.func @transform_0(%arg0: i32) -> (i32, i32) {
    %c0_i32 = arith.constant 0 : i32
    %c0_i32_0 = arith.constant 0 : i32
    return %arg0, %c0_i32 : i32, i32
  }
  func.func @transform_1(%arg0: i32) -> (i32, i32) {
    %c0_i32 = arith.constant 0 : i32
    %c0_i32_0 = arith.constant 0 : i32
    return %arg0, %c0_i32 : i32, i32
  }
  func.func @transform_2(%arg0: i32) -> (i32, i32) {
    %c0_i32 = arith.constant 0 : i32
    %c0_i32_0 = arith.constant 0 : i32
    %c0_i32_1 = arith.constant 0 : i32
    return %c0_i32, %c0_i32_0 : i32, i32
  }
  func.func @transform_3(%arg0: i32) -> (i32, i32) {
    %c0_i32 = arith.constant 0 : i32
    %c0_i32_0 = arith.constant 0 : i32
    %c0_i32_1 = arith.constant 0 : i32
    return %c0_i32, %c0_i32_0 : i32, i32
  }
  func.func @transform_4(%arg0: i32) -> (i32, i32) {
    %c0_i32 = arith.constant 0 : i32
    %c0_i32_0 = arith.constant 0 : i32
    %c0_i32_1 = arith.constant 0 : i32
    return %c0_i32, %c0_i32_0 : i32, i32
  }
  func.func @transform_5(%arg0: i32) -> (i32, i32) {
    %c0_i32 = arith.constant 0 : i32
    %c0_i32_0 = arith.constant 0 : i32
    %c0_i32_1 = arith.constant 0 : i32
    return %c0_i32, %c0_i32_0 : i32, i32
  }
  func.func @transform_6(%arg0: i32) -> (i32, i32) {
    %c0_i32 = arith.constant 0 : i32
    %c0_i32_0 = arith.constant 0 : i32
    %c0_i32_1 = arith.constant 0 : i32
    return %c0_i32, %c0_i32_0 : i32, i32
  }
  func.func @transform_7(%arg0: i32) -> (i32, i32) {
    %c0_i32 = arith.constant 0 : i32
    %c0_i32_0 = arith.constant 0 : i32
    %c0_i32_1 = arith.constant 0 : i32
    return %c0_i32, %c0_i32_0 : i32, i32
  }
  func.func @transform_8(%arg0: i32) -> (i32, i32) {
    %c0_i32 = arith.constant 0 : i32
    %c0_i32_0 = arith.constant 0 : i32
    %c0_i32_1 = arith.constant 0 : i32
    return %c0_i32, %c0_i32_0 : i32, i32
  }
  func.func @transform_9(%arg0: i32) -> (i32, i32) {
    %c0_i32 = arith.constant 0 : i32
    %c0_i32_0 = arith.constant 0 : i32
    return %arg0, %c0_i32 : i32, i32
  }
  func.func @transform_10(%arg0: i32) -> (i32, i32) {
    %c0_i32 = arith.constant 0 : i32
    %c0_i32_0 = arith.constant 0 : i32
    return %arg0, %c0_i32 : i32, i32
  }
  func.func @transform_11(%arg0: i32) -> (i32, i32) {
    %c0_i32 = arith.constant 0 : i32
    %c0_i32_0 = arith.constant 0 : i32
    return %arg0, %c0_i32 : i32, i32
  }
}

</mosaic_0001>

<llo_original>
// kernel: _edge_to_node_attention_impl.2
$region0: #{_edge_to_node_attention_impl.2}
  #allocation0 [shape = 'u32[]', space=smem, size = 0x4, offset = 0x4, fixed_abs, tag = 'smem constant byte address 0x4 - core index']
  #allocation1 [shape = 'u32[144,128]{1,0:T(1,128)}', space=vmem, size = 0x12000, scoped, tag = 'internal scratch']
  %s0 = inlined_call_operand.vmem [shape: f32[32,8], index: 0, kind: input, shape index: {}]
  %s1 = inlined_call_operand.vmem [shape: f32[8,33], index: 1, kind: input, shape index: {}]
  %s2 = inlined_call_operand.vmem [shape: f32[1,33], index: 2, kind: input, shape index: {}]
  %s3 = inlined_call_operand.vmem [shape: bf16[32,33], index: 3, kind: output, shape index: {}]
  %s4 = sld [smem:[#allocation0]]
  $region22: #{_edge_to_node_attention_impl.2} parent=0
    _
  %s6 = ssub.s32 1, %s4
  %s7 = scalar_select 0, %s6, %s4
  // Predicated region
  $region2: #{_edge_to_node_attention_impl.2} parent=0 // pred_check
    _
  $region3: #{_edge_to_node_attention_impl.2} parent=0 // pred_check_branch
    %9 = sbr.rel (0) target = $region5
  $region4: #{_edge_to_node_attention_impl.2} parent=0 // pred_region
    _
  $region5: #{_edge_to_node_attention_impl.2} parent=0 // pred_fallthru
    _
  // Predicated region
  $region6: #{_edge_to_node_attention_impl.2} parent=0 // pred_check
    _
  $region7: #{_edge_to_node_attention_impl.2} parent=0 // pred_check_branch
    %11 = sbr.rel (0) target = $region9
  $region8: #{_edge_to_node_attention_impl.2} parent=0 // pred_region
    _
  $region9: #{_edge_to_node_attention_impl.2} parent=0 // pred_fallthru
    _
  // Predicated region
  $region10: #{_edge_to_node_attention_impl.2} parent=0 // pred_check
    _
  $region11: #{_edge_to_node_attention_impl.2} parent=0 // pred_check_branch
    %13 = sbr.rel (0) target = $region13
  $region12: #{_edge_to_node_attention_impl.2} parent=0 // pred_region
    _
  $region13: #{_edge_to_node_attention_impl.2} parent=0 // pred_fallthru
    _
  %v14 = vld [vmem:[%s0] sm:$0xff]
  %v15 = vld [vmem:[%s0 + $0x8] sm:$0xff]
  %v16 = vld [vmem:[%s0 + $0x10] sm:$0xff]
  %v17 = vld [vmem:[%s0 + $0x18] sm:$0xff]
  %v18 = vld [vmem:[%s1] sm:$0xff]
  %v19 = vld [vmem:[%s2] sm:$0x1]
  %v21 = vlaneseq
  %v22 = vshrl.u32 %v21, 7
  %v23 = vsub.s32 0, %v22
  %v24 = vrot.slane %v19, %v23
  %vm26 = vcmask 64512
  %v28 = vsel %vm26, %v14, 0
  %v31 = vsel %vm26, %v15, 0
  %v34 = vsel %vm26, %v16, 0
  %v37 = vsel %vm26, %v17, 0
  %39 = vmatprep.subr.mxu0 0.0
  %40 = vmatpush1.msra.mxu0 0.0
  %41 = vmatprep.subr.mxu0 0.0
  %42 = vmatpush1.msra.mxu0 0.0
  %43 = vmatprep.subr.mxu0 0.0
  %44 = vmatpush1.msra.mxu0 0.0
  %45 = vmatprep.subr.mxu0 0.0
  %46 = vmatpush1.msra.mxu0 0.0
  %47 = vmatprep.subr.mxu0 0.0
  %48 = vmatpush1.msra.mxu0 0.0
  %49 = vmatprep.subr.mxu0 0.0
  %50 = vmatpush1.msra.mxu0 0.0
  %51 = vmatprep.subr.mxu0 0.0
  %52 = vmatpush1.msra.mxu0 0.0
  %53 = vmatprep.subr.mxu0 0.0
  %54 = vmatpush1.msra.mxu0 0.0
  %55 = vmatprep.subr.mxu0 0.0
  %56 = vmatpush1.msra.mxu0 0.0
  %57 = vmatprep.subr.mxu0 0.0
  %58 = vmatpush1.msra.mxu0 0.0
  %59 = vmatprep.subr.mxu0 0.0
  %60 = vmatpush1.msra.mxu0 0.0
  %61 = vmatprep.subr.mxu0 0.0
  %62 = vmatpush1.msra.mxu0 0.0
  %63 = vmatprep.subr.mxu0 0.0
  %64 = vmatpush1.msra.mxu0 0.0
  %65 = vmatprep.subr.mxu0 0.0
  %66 = vmatpush1.msra.mxu0 0.0
  %67 = vmatprep.subr.mxu0 0.0
  %68 = vmatpush1.msra.mxu0 0.0
  %69 = vmatprep.subr.mxu0 0.0
  %70 = vmatpush1.msra.mxu0 %v18
  %71 = vmatprep.subr.mxu0 0.0
  %72 = vmatpush2.msra.mxu0 0.0
  %73 = vmatprep.subr.mxu0 0.0
  %74 = vmatpush2.msra.mxu0 0.0
  %75 = vmatprep.subr.mxu0 0.0
  %76 = vmatpush2.msra.mxu0 0.0
  %77 = vmatprep.subr.mxu0 0.0
  %78 = vmatpush2.msra.mxu0 0.0
  %79 = vmatprep.subr.mxu0 0.0
  %80 = vmatpush2.msra.mxu0 0.0
  %81 = vmatprep.subr.mxu0 0.0
  %82 = vmatpush2.msra.mxu0 0.0
  %83 = vmatprep.subr.mxu0 0.0
  %84 = vmatpush2.msra.mxu0 0.0
  %85 = vmatprep.subr.mxu0 0.0
  %86 = vmatpush2.msra.mxu0 0.0
  %87 = vmatprep.subr.mxu0 0.0
  %88 = vmatpush2.msra.mxu0 0.0
  %89 = vmatprep.subr.mxu0 0.0
  %90 = vmatpush2.msra.mxu0 0.0
  %91 = vmatprep.subr.mxu0 0.0
  %92 = vmatpush2.msra.mxu0 0.0
  %93 = vmatprep.subr.mxu0 0.0
  %94 = vmatpush2.msra.mxu0 0.0
  %95 = vmatprep.subr.mxu0 0.0
  %96 = vmatpush2.msra.mxu0 0.0
  %97 = vmatprep.subr.mxu0 0.0
  %98 = vmatpush2.msra.mxu0 0.0
  %99 = vmatprep.subr.mxu0 0.0
  %100 = vmatpush2.msra.mxu0 0.0
  %101 = vmatprep.subr.mxu0 0.0
  %102 = vmatpush2.msra.mxu0 0.0
  %103 = vmatprep.mubr.f32.mxu0 0.0
  %104 = vmatmul.mubr.f32.gmra.mxu0 %v28
  %v105 = vpop.f32.mrf.mxu0
  %v106 = vadd.f32 %v24, %v105
  %v107 = vpop.f32.mrf.mxu0
  %108 = vmatprep.mubr.f32.mxu0 0.0
  %109 = vmatmul.mubr.f32.gmra.mxu0 %v31
  %v110 = vpop.f32.mrf.mxu0
  %v111 = vadd.f32 %v24, %v110
  %v112 = vpop.f32.mrf.mxu0
  %113 = vmatprep.mubr.f32.mxu0 0.0
  %114 = vmatmul.mubr.f32.gmra.mxu0 %v34
  %v115 = vpop.f32.mrf.mxu0
  %v116 = vadd.f32 %v24, %v115
  %v117 = vpop.f32.mrf.mxu0
  %118 = vmatprep.mubr.f32.mxu0 0.0
  %119 = vmatmul.mubr.f32.gmra.mxu0 %v37
  %v120 = vpop.f32.mrf.mxu0
  %v121 = vadd.f32 %v24, %v120
  %v122 = vpop.f32.mrf.mxu0
  %123 = vdwg.mxu0
  %v124 = vpack.c.bf16 %v111, %v106
  %v125 = vpack.c.bf16 %v121, %v116
  %v128 = vunpack.c.l.b16 %v124
  %v129 = vunpack.c.h.b16 %v124
  %v130 = vunpack.c.l.b16 %v125
  %v131 = vunpack.c.h.b16 %v125
  %v132 = vpack.c.b16 %v128, %v128
  %v133 = vpack.c.b16 %v129, %v129
  %v134 = vpack.c.b16 %v130, %v130
  %v135 = vpack.c.b16 %v131, %v131
  %vm140 = vcmask 265216
  %141 = vst.msk [vmem:[%s3] sm:$0xf] %vm140, %v132
  %142 = vst.msk [vmem:[%s3 + $0x4] sm:$0xf] %vm140, %v133
  %143 = vst.msk [vmem:[%s3 + $0x8] sm:$0xf] %vm140, %v134
  %144 = vst.msk [vmem:[%s3 + $0xc] sm:$0xf] %vm140, %v135
  // Predicated region
  $region14: #{_edge_to_node_attention_impl.2} parent=0 // pred_check
    _
  $region15: #{_edge_to_node_attention_impl.2} parent=0 // pred_check_branch
    %146 = sbr.rel (0) target = $region17
  $region16: #{_edge_to_node_attention_impl.2} parent=0 // pred_region
    _
  $region17: #{_edge_to_node_attention_impl.2} parent=0 // pred_fallthru
    _
  // Predicated region
  $region18: #{_edge_to_node_attention_impl.2} parent=0 // pred_check
    _
  $region19: #{_edge_to_node_attention_impl.2} parent=0 // pred_check_branch
    %148 = sbr.rel (0) target = $region21
  $region20: #{_edge_to_node_attention_impl.2} parent=0 // pred_region
    _
  $region21: #{_edge_to_node_attention_impl.2} parent=0 // pred_fallthru
    _

// kernel: _edge_to_node_attention_impl.3
$region0: #{_edge_to_node_attention_impl.3}
  #allocation0 [shape = 'u32[]', space=smem, size = 0x4, offset = 0x4, fixed_abs, tag = 'smem constant byte address 0x4 - core index']
  #allocation1 [shape = 'u32[144,128]{1,0:T(1,128)}', space=vmem, size = 0x12000, scoped, tag = 'internal scratch']
  #allocation2 [shape = 'f32[1,1]{1,0:T(1,128)S(6)}', space=smem, size = 0x200, scoped, tag = 'scoped memory for _edge_to_node_attention_impl.3']
  %s0 = inlined_call_operand.vmem [shape: f32[64,16], index: 0, kind: input, shape index: {}]
  %s1 = inlined_call_operand.vmem [shape: s8[64,32], index: 1, kind: input, shape index: {}]
  %s2 = inlined_call_operand.vmem [shape: bf16[32,33], index: 2, kind: input, shape index: {}]
  %s3 = inlined_call_operand.vmem [shape: f32[16,33], index: 3, kind: input, shape index: {}]
  %s4 = inlined_call_operand.vmem [shape: f32[1,33], index: 4, kind: input, shape index: {}]
  %s5 = inlined_call_operand.vmem [shape: f32[1,33], index: 5, kind: input, shape index: {}]
  %s6 = inlined_call_operand.<no memory space> [shape: f32[1,1], index: 6, kind: input, shape index: {}]
  %s7 = inlined_call_operand.vmem [shape: f32[33,128], index: 7, kind: input, shape index: {}]
  %s8 = inlined_call_operand.vmem [shape: f32[1,128], index: 8, kind: input, shape index: {}]
  %s9 = inlined_call_operand.vmem [shape: f32[64,128], index: 9, kind: output, shape index: {0}]
  %s10 = inlined_call_operand.hbm [shape: f32[8,128], index: 10, kind: output, shape index: {1}]
  %s11 = inlined_call_operand.hbm [shape: f32[8,128], index: 11, kind: output, shape index: {2}]
  %12 = xla_tuple %s9, %s10, %s11
  %s13 = sld [smem:[#allocation0]]
  $region62: #{_edge_to_node_attention_impl.3} parent=0
    _
  %s15 = ssub.s32 1, %s13
  %s16 = scalar_select 0, %s15, %s13
  %17 = sst [smem:[#allocation2]] %s6
  $region1: #{_edge_to_node_attention_impl.3} parent=0
    #allocation3 [shape = 'u8[4096]{0}', space=vmem, size = 0x1000, scoped, tag = 'output window, operand 1, single buffered']
    #allocation4 [shape = 's32[1]{0}', space=sflag, size = 0x4, scoped, tag = 'scoped memory for _edge_to_node_attention_impl.3']
    #allocation5 [shape = 'u8[4096]{0}', space=vmem, size = 0x1000, scoped, tag = 'output window, operand 2, single buffered']
    #allocation6 [shape = 's32[1]{0}', space=sflag, size = 0x4, scoped, tag = 'scoped memory for _edge_to_node_attention_impl.3']
    %18 = vsyncpa [#allocation4], 0
    %19 = vsyncpa [#allocation6], 0
    // Predicated region
    $region2: #{_edge_to_node_attention_impl.3} parent=1 // pred_check
      _
    $region3: #{_edge_to_node_attention_impl.3} parent=1 // pred_check_branch
      %21 = sbr.rel (0) target = $region5
    $region4: #{_edge_to_node_attention_impl.3} parent=1 // pred_region
      _
    $region5: #{_edge_to_node_attention_impl.3} parent=1 // pred_fallthru
      _
    // Predicated region
    $region6: #{_edge_to_node_attention_impl.3} parent=1 // pred_check
      _
    $region7: #{_edge_to_node_attention_impl.3} parent=1 // pred_check_branch
      %23 = sbr.rel (0) target = $region9
    $region8: #{_edge_to_node_attention_impl.3} parent=1 // pred_region
      _
    $region9: #{_edge_to_node_attention_impl.3} parent=1 // pred_fallthru
      _
    // Predicated region
    $region10: #{_edge_to_node_attention_impl.3} parent=1 // pred_check
      _
    $region11: #{_edge_to_node_attention_impl.3} parent=1 // pred_check_branch
      %25 = sbr.rel (0) target = $region13
    $region12: #{_edge_to_node_attention_impl.3} parent=1 // pred_region
      _
    $region13: #{_edge_to_node_attention_impl.3} parent=1 // pred_fallthru
      _
    // Predicated region
    $region14: #{_edge_to_node_attention_impl.3} parent=1 // pred_check
      _
    $region15: #{_edge_to_node_attention_impl.3} parent=1 // pred_check_branch
      %27 = sbr.rel (0) target = $region17
    $region16: #{_edge_to_node_attention_impl.3} parent=1 // pred_region
      _
    $region17: #{_edge_to_node_attention_impl.3} parent=1 // pred_fallthru
      _
    // Predicated region
    $region18: #{_edge_to_node_attention_impl.3} parent=1 // pred_check
      _
    $region19: #{_edge_to_node_attention_impl.3} parent=1 // pred_check_branch
      %29 = sbr.rel (0) target = $region21
    $region20: #{_edge_to_node_attention_impl.3} parent=1 // pred_region
      _
    $region21: #{_edge_to_node_attention_impl.3} parent=1 // pred_fallthru
      _
    // Predicated region
    $region22: #{_edge_to_node_attention_impl.3} parent=1 // pred_check
      _
    $region23: #{_edge_to_node_attention_impl.3} parent=1 // pred_check_branch
      %31 = sbr.rel (0) target = $region25
    $region24: #{_edge_to_node_attention_impl.3} parent=1 // pred_region
      _
    $region25: #{_edge_to_node_attention_impl.3} parent=1 // pred_fallthru
      _
    // Predicated region
    $region26: #{_edge_to_node_attention_impl.3} parent=1 // pred_check
      _
    $region27: #{_edge_to_node_attention_impl.3} parent=1 // pred_check_branch
      %33 = sbr.rel (0) target = $region29
    $region28: #{_edge_to_node_attention_impl.3} parent=1 // pred_region
      _
    $region29: #{_edge_to_node_attention_impl.3} parent=1 // pred_fallthru
      _
    // Predicated region
    $region30: #{_edge_to_node_attention_impl.3} parent=1 // pred_check
      _
    $region31: #{_edge_to_node_attention_impl.3} parent=1 // pred_check_branch
      %35 = sbr.rel (0) target = $region33
    $region32: #{_edge_to_node_attention_impl.3} parent=1 // pred_region
      _
    $region33: #{_edge_to_node_attention_impl.3} parent=1 // pred_fallthru
      _
    // Predicated region
    $region34: #{_edge_to_node_attention_impl.3} parent=1 // pred_check
      _
    $region35: #{_edge_to_node_attention_impl.3} parent=1 // pred_check_branch
      %37 = sbr.rel (0) target = $region37
    $region36: #{_edge_to_node_attention_impl.3} parent=1 // pred_region
      _
    $region37: #{_edge_to_node_attention_impl.3} parent=1 // pred_fallthru
      _
    %v39 = vld [vmem:[%s0] sm:$0xff]
    %v40 = vld [vmem:[%s0 + $0x8] sm:$0xff]
    %v41 = vld [vmem:[%s0 + $0x10] sm:$0xff]
    %v42 = vld [vmem:[%s0 + $0x18] sm:$0xff]
    %v43 = vld [vmem:[%s0 + $0x20] sm:$0xff]
    %v44 = vld [vmem:[%s0 + $0x28] sm:$0xff]
    %v45 = vld [vmem:[%s0 + $0x30] sm:$0xff]
    %v46 = vld [vmem:[%s0 + $0x38] sm:$0xff]
    %v47 = vld [vmem:[%s1] sm:$0xff]
    %v48 = vld [vmem:[%s1 + $0x8] sm:$0xff]
    %v49 = vunpack.c.l.s8.bf16 %v47
    %v50 = vunpack.c.h.s8.bf16 %v47
    %v51 = vunpack.c.l.s8.bf16 %v48
    %v52 = vunpack.c.h.s8.bf16 %v48
    %v53 = vld [vmem:[%s2] sm:$0xf]
    %v54 = vld [vmem:[%s2 + $0x4] sm:$0xf]
    %v55 = vld [vmem:[%s2 + $0x8] sm:$0xf]
    %v56 = vld [vmem:[%s2 + $0xc] sm:$0xf]
    %v57 = vld [vmem:[%s3] sm:$0xff]
    %v58 = vld [vmem:[%s3 + $0x8] sm:$0xff]
    %v59 = vld [vmem:[%s4] sm:$0x1]
    %v61 = vlaneseq
    %v62 = vshrl.u32 %v61, 7
    %v63 = vsub.s32 0, %v62
    %v64 = vrot.slane %v59, %v63
    %vm66 = vcmask 130048
    %v68 = vsel %vm66, %v39, 0
    %v71 = vsel %vm66, %v40, 0
    %v74 = vsel %vm66, %v41, 0
    %v77 = vsel %vm66, %v42, 0
    %v80 = vsel %vm66, %v43, 0
    %v83 = vsel %vm66, %v44, 0
    %v86 = vsel %vm66, %v45, 0
    %v89 = vsel %vm66, %v46, 0
    %91 = vmatprep.subr.mxu0 0.0
    %92 = vmatpush1.msra.mxu0 0.0
    %93 = vmatprep.subr.mxu0 0.0
    %94 = vmatpush1.msra.mxu0 0.0
    %95 = vmatprep.subr.mxu0 0.0
    %96 = vmatpush1.msra.mxu0 0.0
    %97 = vmatprep.subr.mxu0 0.0
    %98 = vmatpush1.msra.mxu0 0.0
    %99 = vmatprep.subr.mxu0 0.0
    %100 = vmatpush1.msra.mxu0 0.0
    %101 = vmatprep.subr.mxu0 0.0
    %102 = vmatpush1.msra.mxu0 0.0
    %103 = vmatprep.subr.mxu0 0.0
    %104 = vmatpush1.msra.mxu0 0.0
    %105 = vmatprep.subr.mxu0 0.0
    %106 = vmatpush1.msra.mxu0 0.0
    %107 = vmatprep.subr.mxu0 0.0
    %108 = vmatpush1.msra.mxu0 0.0
    %109 = vmatprep.subr.mxu0 0.0
    %110 = vmatpush1.msra.mxu0 0.0
    %111 = vmatprep.subr.mxu0 0.0
    %112 = vmatpush1.msra.mxu0 0.0
    %113 = vmatprep.subr.mxu0 0.0
    %114 = vmatpush1.msra.mxu0 0.0
    %115 = vmatprep.subr.mxu0 0.0
    %116 = vmatpush1.msra.mxu0 0.0
    %117 = vmatprep.subr.mxu0 0.0
    %118 = vmatpush1.msra.mxu0 0.0
    %119 = vmatprep.subr.mxu0 0.0
    %120 = vmatpush1.msra.mxu0 %v58
    %121 = vmatprep.subr.mxu0 0.0
    %122 = vmatpush1.msra.mxu0 %v57
    %123 = vmatprep.subr.mxu0 0.0
    %124 = vmatpush2.msra.mxu0 0.0
    %125 = vmatprep.subr.mxu0 0.0
    %126 = vmatpush2.msra.mxu0 0.0
    %127 = vmatprep.subr.mxu0 0.0
    %128 = vmatpush2.msra.mxu0 0.0
    %129 = vmatprep.subr.mxu0 0.0
    %130 = vmatpush2.msra.mxu0 0.0
    %131 = vmatprep.subr.mxu0 0.0
    %132 = vmatpush2.msra.mxu0 0.0
    %133 = vmatprep.subr.mxu0 0.0
    %134 = vmatpush2.msra.mxu0 0.0
    %135 = vmatprep.subr.mxu0 0.0
    %136 = vmatpush2.msra.mxu0 0.0
    %137 = vmatprep.subr.mxu0 0.0
    %138 = vmatpush2.msra.mxu0 0.0
    %139 = vmatprep.subr.mxu0 0.0
    %140 = vmatpush2.msra.mxu0 0.0
    %141 = vmatprep.subr.mxu0 0.0
    %142 = vmatpush2.msra.mxu0 0.0
    %143 = vmatprep.subr.mxu0 0.0
    %144 = vmatpush2.msra.mxu0 0.0
    %145 = vmatprep.subr.mxu0 0.0
    %146 = vmatpush2.msra.mxu0 0.0
    %147 = vmatprep.subr.mxu0 0.0
    %148 = vmatpush2.msra.mxu0 0.0
    %149 = vmatprep.subr.mxu0 0.0
    %150 = vmatpush2.msra.mxu0 0.0
    %151 = vmatprep.subr.mxu0 0.0
    %152 = vmatpush2.msra.mxu0 0.0
    %153 = vmatprep.subr.mxu0 0.0
    %154 = vmatpush2.msra.mxu0 0.0
    %155 = vmatprep.mubr.f32.mxu0 0.0
    %156 = vmatmul.mubr.f32.gmra.mxu0 %v68
    %v157 = vpop.f32.mrf.mxu0
    %v158 = vadd.f32 %v64, %v157
    %v159 = vpop.f32.mrf.mxu0
    %160 = vmatprep.mubr.f32.mxu0 0.0
    %161 = vmatmul.mubr.f32.gmra.mxu0 %v71
    %v162 = vpop.f32.mrf.mxu0
    %v163 = vadd.f32 %v64, %v162
    %v164 = vpop.f32.mrf.mxu0
    %165 = vmatprep.mubr.f32.mxu0 0.0
    %166 = vmatmul.mubr.f32.gmra.mxu0 %v74
    %v167 = vpop.f32.mrf.mxu0
    %v168 = vadd.f32 %v64, %v167
    %v169 = vpop.f32.mrf.mxu0
    %170 = vmatprep.mubr.f32.mxu0 0.0
    %171 = vmatmul.mubr.f32.gmra.mxu0 %v77
    %v172 = vpop.f32.mrf.mxu0
    %v173 = vadd.f32 %v64, %v172
    %v174 = vpop.f32.mrf.mxu0
    %175 = vmatprep.mubr.f32.mxu0 0.0
    %176 = vmatmul.mubr.f32.gmra.mxu0 %v80
    %v177 = vpop.f32.mrf.mxu0
    %v178 = vadd.f32 %v64, %v177
    %v179 = vpop.f32.mrf.mxu0
    %180 = vmatprep.mubr.f32.mxu0 0.0
    %181 = vmatmul.mubr.f32.gmra.mxu0 %v83
    %v182 = vpop.f32.mrf.mxu0
    %v183 = vadd.f32 %v64, %v182
    %v184 = vpop.f32.mrf.mxu0
    %185 = vmatprep.mubr.f32.mxu0 0.0
    %186 = vmatmul.mubr.f32.gmra.mxu0 %v86
    %v187 = vpop.f32.mrf.mxu0
    %v188 = vadd.f32 %v64, %v187
    %v189 = vpop.f32.mrf.mxu0
    %190 = vmatprep.mubr.f32.mxu0 0.0
    %191 = vmatmul.mubr.f32.gmra.mxu0 %v89
    %v192 = vpop.f32.mrf.mxu0
    %v193 = vadd.f32 %v64, %v192
    %v194 = vpop.f32.mrf.mxu0
    %195 = vdwg.mxu0
    %v200 = vunpack.c.l.b16 %v53
    %v201 = vunpack.c.l.b16 %v54
    %v202 = vunpack.c.l.b16 %v55
    %v203 = vunpack.c.l.b16 %v56
    %v204 = vpack.c.b16 %v201, %v200
    %v205 = vpack.c.b16 %v203, %v202
    %vm208 = vcmask 261120
    %v210 = vsel %vm208, %v49, 0
    %v213 = vsel %vm208, %v50, 0
    %v216 = vsel %vm208, %v51, 0
    %v219 = vsel %vm208, %v52, 0
    %221 = vmatprep.subr.bf16.mxu0 0
    %222 = vmatpush1.bf16.msra.mxu0 0
    %223 = vmatprep.subr.bf16.mxu0 0
    %224 = vmatpush1.bf16.msra.mxu0 0
    %225 = vmatprep.subr.bf16.mxu0 0
    %226 = vmatpush1.bf16.msra.mxu0 0
    %227 = vmatprep.subr.bf16.mxu0 0
    %228 = vmatpush1.bf16.msra.mxu0 0
    %229 = vmatprep.subr.bf16.mxu0 0
    %230 = vmatpush1.bf16.msra.mxu0 0
    %231 = vmatprep.subr.bf16.mxu0 0
    %232 = vmatpush1.bf16.msra.mxu0 0
    %233 = vmatprep.subr.bf16.mxu0 0
    %234 = vmatpush1.bf16.msra.mxu0 %v205
    %235 = vmatprep.subr.bf16.mxu0 0
    %236 = vmatpush1.bf16.msra.mxu0 %v204
    %237 = vmatprep.subr.bf16.mxu0 0
    %238 = vmatpush2.bf16.msra.mxu0 0
    %239 = vmatprep.subr.bf16.mxu0 0
    %240 = vmatpush2.bf16.msra.mxu0 0
    %241 = vmatprep.subr.bf16.mxu0 0
    %242 = vmatpush2.bf16.msra.mxu0 0
    %243 = vmatprep.subr.bf16.mxu0 0
    %244 = vmatpush2.bf16.msra.mxu0 0
    %245 = vmatprep.subr.bf16.mxu0 0
    %246 = vmatpush2.bf16.msra.mxu0 0
    %247 = vmatprep.subr.bf16.mxu0 0
    %248 = vmatpush2.bf16.msra.mxu0 0
    %249 = vmatprep.subr.bf16.mxu0 0
    %250 = vmatpush2.bf16.msra.mxu0 0
    %251 = vmatprep.subr.bf16.mxu0 0
    %252 = vmatpush2.bf16.msra.mxu0 0
    %253 = vmatprep.mubr.bf16.mxu0 0
    %254 = vmatmul.mubr.bf16.gmra.mxu0 %v210
    %v255 = vpop.f32.mrf.mxu0
    %v256 = vadd.f32 0.0, %v255
    %v257 = vpop.f32.mrf.mxu0
    %v258 = vpop.f32.mrf.mxu0
    %v259 = vadd.f32 0.0, %v258
    %v260 = vpop.f32.mrf.mxu0
    %261 = vmatprep.mubr.bf16.mxu0 0
    %262 = vmatmul.mubr.bf16.gmra.mxu0 %v213
    %v263 = vpop.f32.mrf.mxu0
    %v264 = vadd.f32 0.0, %v263
    %v265 = vpop.f32.mrf.mxu0
    %v266 = vpop.f32.mrf.mxu0
    %v267 = vadd.f32 0.0, %v266
    %v268 = vpop.f32.mrf.mxu0
    %269 = vmatprep.mubr.bf16.mxu0 0
    %270 = vmatmul.mubr.bf16.gmra.mxu0 %v216
    %v271 = vpop.f32.mrf.mxu0
    %v272 = vadd.f32 0.0, %v271
    %v273 = vpop.f32.mrf.mxu0
    %v274 = vpop.f32.mrf.mxu0
    %v275 = vadd.f32 0.0, %v274
    %v276 = vpop.f32.mrf.mxu0
    %277 = vmatprep.mubr.bf16.mxu0 0
    %278 = vmatmul.mubr.bf16.gmra.mxu0 %v219
    %v279 = vpop.f32.mrf.mxu0
    %v280 = vadd.f32 0.0, %v279
    %v281 = vpop.f32.mrf.mxu0
    %v282 = vpop.f32.mrf.mxu0
    %v283 = vadd.f32 0.0, %v282
    %v284 = vpop.f32.mrf.mxu0
    %285 = vdwg.mxu0
    %v286 = vadd.f32 %v256, 1e-08
    %v287 = vadd.f32 %v259, 1e-08
    %v288 = vadd.f32 %v264, 1e-08
    %v289 = vadd.f32 %v267, 1e-08
    %v290 = vadd.f32 %v272, 1e-08
    %v291 = vadd.f32 %v275, 1e-08
    %v292 = vadd.f32 %v280, 1e-08
    %v293 = vadd.f32 %v283, 1e-08
    %v294 = vrcp.pop %v286
    %v295 = vrcp.pop %v287
    %v296 = vrcp.pop %v288
    %v297 = vrcp.pop %v289
    %v298 = vrcp.pop %v290
    %v299 = vrcp.pop %v291
    %v300 = vrcp.pop %v292
    %v301 = vrcp.pop %v293
    %303 = vset.pattern.permute.xlu0 32
    %304 = vperm.xlu0 %303, %v294
    %v305 = vpop.permute.xlu0 %304
    %308 = vset.pattern.permute.xlu0 32
    %309 = vperm.xlu0 %308, %v295
    %v310 = vpop.permute.xlu0 %309
    %313 = vset.pattern.permute.xlu0 32
    %314 = vperm.xlu0 %313, %v296
    %v315 = vpop.permute.xlu0 %314
    %318 = vset.pattern.permute.xlu0 32
    %319 = vperm.xlu0 %318, %v297
    %v320 = vpop.permute.xlu0 %319
    %323 = vset.pattern.permute.xlu0 32
    %324 = vperm.xlu0 %323, %v298
    %v325 = vpop.permute.xlu0 %324
    %328 = vset.pattern.permute.xlu0 32
    %329 = vperm.xlu0 %328, %v299
    %v330 = vpop.permute.xlu0 %329
    %333 = vset.pattern.permute.xlu0 32
    %334 = vperm.xlu0 %333, %v300
    %v335 = vpop.permute.xlu0 %334
    %338 = vset.pattern.permute.xlu0 32
    %339 = vperm.xlu0 %338, %v301
    %v340 = vpop.permute.xlu0 %339
    %v342 = vmul.f32 %v256, %v305
    %v343 = vmul.f32 %v259, %v310
    %v344 = vmul.f32 %v264, %v315
    %v345 = vmul.f32 %v267, %v320
    %v346 = vmul.f32 %v272, %v325
    %v347 = vmul.f32 %v275, %v330
    %v348 = vmul.f32 %v280, %v335
    %v349 = vmul.f32 %v283, %v340
    %v350 = vadd.f32 %v158, %v342
    %v351 = vadd.f32 %v163, %v343
    %v352 = vadd.f32 %v168, %v344
    %v353 = vadd.f32 %v173, %v345
    %v354 = vadd.f32 %v178, %v346
    %v355 = vadd.f32 %v183, %v347
    %v356 = vadd.f32 %v188, %v348
    %v357 = vadd.f32 %v193, %v349
    %v358 = vld [vmem:[%s5] sm:$0x1]
    %v360 = vlaneseq
    %v361 = vshrl.u32 %v360, 7
    %v362 = vsub.s32 0, %v361
    %v363 = vrot.slane %v358, %v362
    %v365 = vmul.f32 %v350, %v363
    %v366 = vmul.f32 %v351, %v363
    %v367 = vmul.f32 %v352, %v363
    %v368 = vmul.f32 %v353, %v363
    %v369 = vmul.f32 %v354, %v363
    %v370 = vmul.f32 %v355, %v363
    %v371 = vmul.f32 %v356, %v363
    %v372 = vmul.f32 %v357, %v363
    %vm373 = vcmask 269312
    %v374 = vsel %vm373, %v365, 0.0
    %375 = vadd.xlane.f32.xlu0 %v374
    %v376 = vpop.xlane.xlu0 %375
    %v377 = vsel %vm373, %v366, 0.0
    %378 = vadd.xlane.f32.xlu0 %v377
    %v379 = vpop.xlane.xlu0 %378
    %v380 = vsel %vm373, %v367, 0.0
    %381 = vadd.xlane.f32.xlu0 %v380
    %v382 = vpop.xlane.xlu0 %381
    %v383 = vsel %vm373, %v368, 0.0
    %384 = vadd.xlane.f32.xlu0 %v383
    %v385 = vpop.xlane.xlu0 %384
    %v386 = vsel %vm373, %v369, 0.0
    %387 = vadd.xlane.f32.xlu0 %v386
    %v388 = vpop.xlane.xlu0 %387
    %v389 = vsel %vm373, %v370, 0.0
    %390 = vadd.xlane.f32.xlu0 %v389
    %v391 = vpop.xlane.xlu0 %390
    %v392 = vsel %vm373, %v371, 0.0
    %393 = vadd.xlane.f32.xlu0 %v392
    %v394 = vpop.xlane.xlu0 %393
    %v395 = vsel %vm373, %v372, 0.0
    %396 = vadd.xlane.f32.xlu0 %v395
    %v397 = vpop.xlane.xlu0 %396
    %s398 = sld [smem:[#allocation2]]
    %v399 = vstv %s398
    %v400 = vadd.f32 %v376, %v399
    %v401 = vadd.f32 %v379, %v399
    %v402 = vadd.f32 %v382, %v399
    %v403 = vadd.f32 %v385, %v399
    %v404 = vadd.f32 %v388, %v399
    %v405 = vadd.f32 %v391, %v399
    %v406 = vadd.f32 %v394, %v399
    %v407 = vadd.f32 %v397, %v399
    %vm408 = vcmp.gt.f32.partialorder %v400, 0.0
    %vm409 = vcmp.gt.f32.partialorder %v401, 0.0
    %vm410 = vcmp.gt.f32.partialorder %v402, 0.0
    %vm411 = vcmp.gt.f32.partialorder %v403, 0.0
    %vm412 = vcmp.gt.f32.partialorder %v404, 0.0
    %vm413 = vcmp.gt.f32.partialorder %v405, 0.0
    %vm414 = vcmp.gt.f32.partialorder %v406, 0.0
    %vm415 = vcmp.gt.f32.partialorder %v407, 0.0
    %v416 = vmul.f32 %v400, 0.2
    %v417 = vmul.f32 %v401, 0.2
    %v418 = vmul.f32 %v402, 0.2
    %v419 = vmul.f32 %v403, 0.2
    %v420 = vmul.f32 %v404, 0.2
    %v421 = vmul.f32 %v405, 0.2
    %v422 = vmul.f32 %v406, 0.2
    %v423 = vmul.f32 %v407, 0.2
    %v424 = vsel %vm408, %v400, %v416
    %v425 = vsel %vm409, %v401, %v417
    %v426 = vsel %vm410, %v402, %v418
    %v427 = vsel %vm411, %v403, %v419
    %v428 = vsel %vm412, %v404, %v420
    %v429 = vsel %vm413, %v405, %v421
    %v430 = vsel %vm414, %v406, %v422
    %v431 = vsel %vm415, %v407, %v423
    %v432 = vsub.f32 0.0, %v424
    %v433 = vsub.f32 0.0, %v425
    %v434 = vsub.f32 0.0, %v426
    %v435 = vsub.f32 0.0, %v427
    %v436 = vsub.f32 0.0, %v428
    %v437 = vsub.f32 0.0, %v429
    %v438 = vsub.f32 0.0, %v430
    %v439 = vsub.f32 0.0, %v431
    %v440 = vmul.f32 %v432, 1.442695
    %v441 = vpow.pop %v440
    %v442 = vmul.f32 %v433, 1.442695
    %v443 = vpow.pop %v442
    %v444 = vmul.f32 %v434, 1.442695
    %v445 = vpow.pop %v444
    %v446 = vmul.f32 %v435, 1.442695
    %v447 = vpow.pop %v446
    %v448 = vmul.f32 %v436, 1.442695
    %v449 = vpow.pop %v448
    %v450 = vmul.f32 %v437, 1.442695
    %v451 = vpow.pop %v450
    %v452 = vmul.f32 %v438, 1.442695
    %v453 = vpow.pop %v452
    %v454 = vmul.f32 %v439, 1.442695
    %v455 = vpow.pop %v454
    %v456 = vadd.f32 %v441, 1.0
    %v457 = vadd.f32 %v443, 1.0
    %v458 = vadd.f32 %v445, 1.0
    %v459 = vadd.f32 %v447, 1.0
    %v460 = vadd.f32 %v449, 1.0
    %v461 = vadd.f32 %v451, 1.0
    %v462 = vadd.f32 %v453, 1.0
    %v463 = vadd.f32 %v455, 1.0
    %v464 = vrcp.pop %v456
    %v465 = vrcp.pop %v457
    %v466 = vrcp.pop %v458
    %v467 = vrcp.pop %v459
    %v468 = vrcp.pop %v460
    %v469 = vrcp.pop %v461
    %v470 = vrcp.pop %v462
    %v471 = vrcp.pop %v463
    %v472 = vmul.f32 %v464, %v342
    %v473 = vmul.f32 %v465, %v343
    %v474 = vmul.f32 %v466, %v344
    %v475 = vmul.f32 %v467, %v345
    %v476 = vmul.f32 %v468, %v346
    %v477 = vmul.f32 %v469, %v347
    %v478 = vmul.f32 %v470, %v348
    %v479 = vmul.f32 %v471, %v349
    %v480 = vadd.f32 %v472, %v158
    %v481 = vadd.f32 %v473, %v163
    %v482 = vadd.f32 %v474, %v168
    %v483 = vadd.f32 %v475, %v173
    %v484 = vadd.f32 %v476, %v178
    %v485 = vadd.f32 %v477, %v183
    %v486 = vadd.f32 %v478, %v188
    %v487 = vadd.f32 %v479, %v193
    %v488 = vld [vmem:[%s7] sm:$0xff]
    %v489 = vld [vmem:[%s7 + $0x8] sm:$0xff]
    %v490 = vld [vmem:[%s7 + $0x10] sm:$0xff]
    %v491 = vld [vmem:[%s7 + $0x18] sm:$0xff]
    %v492 = vld [vmem:[%s7 + $0x20] sm:$0x1]
    %v493 = vld [vmem:[%s8] sm:$0x1]
    %v495 = vlaneseq
    %v496 = vshrl.u32 %v495, 7
    %v497 = vsub.s32 0, %v496
    %v498 = vrot.slane %v493, %v497
    %v501 = vsel %vm373, %v480, 0
    %v504 = vsel %vm373, %v481, 0
    %v507 = vsel %vm373, %v482, 0
    %v510 = vsel %vm373, %v483, 0
    %v513 = vsel %vm373, %v484, 0
    %v516 = vsel %vm373, %v485, 0
    %v519 = vsel %vm373, %v486, 0
    %v522 = vsel %vm373, %v487, 0
    %vm524 = vcmask 1040384
    %v526 = vsel %vm524, %v492, 0
    %528 = vmatprep.subr.mxu0 0.0
    %529 = vmatpush1.msra.mxu0 0.0
    %530 = vmatprep.subr.mxu0 0.0
    %531 = vmatpush1.msra.mxu0 0.0
    %532 = vmatprep.subr.mxu0 0.0
    %533 = vmatpush1.msra.mxu0 0.0
    %534 = vmatprep.subr.mxu0 0.0
    %535 = vmatpush1.msra.mxu0 0.0
    %536 = vmatprep.subr.mxu0 0.0
    %537 = vmatpush1.msra.mxu0 0.0
    %538 = vmatprep.subr.mxu0 0.0
    %539 = vmatpush1.msra.mxu0 0.0
    %540 = vmatprep.subr.mxu0 0.0
    %541 = vmatpush1.msra.mxu0 0.0
    %542 = vmatprep.subr.mxu0 0.0
    %543 = vmatpush1.msra.mxu0 0.0
    %544 = vmatprep.subr.mxu0 0.0
    %545 = vmatpush1.msra.mxu0 0.0
    %546 = vmatprep.subr.mxu0 0.0
    %547 = vmatpush1.msra.mxu0 0.0
    %548 = vmatprep.subr.mxu0 0.0
    %549 = vmatpush1.msra.mxu0 0.0
    %550 = vmatprep.subr.mxu0 0.0
    %551 = vmatpush1.msra.mxu0 %v526
    %552 = vmatprep.subr.mxu0 0.0
    %553 = vmatpush1.msra.mxu0 %v491
    %554 = vmatprep.subr.mxu0 0.0
    %555 = vmatpush1.msra.mxu0 %v490
    %556 = vmatprep.subr.mxu0 0.0
    %557 = vmatpush1.msra.mxu0 %v489
    %558 = vmatprep.subr.mxu0 0.0
    %559 = vmatpush1.msra.mxu0 %v488
    %560 = vmatprep.subr.mxu0 0.0
    %561 = vmatpush2.msra.mxu0 0.0
    %562 = vmatprep.subr.mxu0 0.0
    %563 = vmatpush2.msra.mxu0 0.0
    %564 = vmatprep.subr.mxu0 0.0
    %565 = vmatpush2.msra.mxu0 0.0
    %566 = vmatprep.subr.mxu0 0.0
    %567 = vmatpush2.msra.mxu0 0.0
    %568 = vmatprep.subr.mxu0 0.0
    %569 = vmatpush2.msra.mxu0 0.0
    %570 = vmatprep.subr.mxu0 0.0
    %571 = vmatpush2.msra.mxu0 0.0
    %572 = vmatprep.subr.mxu0 0.0
    %573 = vmatpush2.msra.mxu0 0.0
    %574 = vmatprep.subr.mxu0 0.0
    %575 = vmatpush2.msra.mxu0 0.0
    %576 = vmatprep.subr.mxu0 0.0
    %577 = vmatpush2.msra.mxu0 0.0
    %578 = vmatprep.subr.mxu0 0.0
    %579 = vmatpush2.msra.mxu0 0.0
    %580 = vmatprep.subr.mxu0 0.0
    %581 = vmatpush2.msra.mxu0 0.0
    %582 = vmatprep.subr.mxu0 0.0
    %583 = vmatpush2.msra.mxu0 0.0
    %584 = vmatprep.subr.mxu0 0.0
    %585 = vmatpush2.msra.mxu0 0.0
    %586 = vmatprep.subr.mxu0 0.0
    %587 = vmatpush2.msra.mxu0 0.0
    %588 = vmatprep.subr.mxu0 0.0
    %589 = vmatpush2.msra.mxu0 0.0
    %590 = vmatprep.subr.mxu0 0.0
    %591 = vmatpush2.msra.mxu0 0.0
    %592 = vmatprep.mubr.f32.mxu0 0.0
    %593 = vmatmul.mubr.f32.gmra.mxu0 %v501
    %v594 = vpop.f32.mrf.mxu0
    %v595 = vadd.f32 %v498, %v594
    %v596 = vpop.f32.mrf.mxu0
    %597 = vmatprep.mubr.f32.mxu0 0.0
    %598 = vmatmul.mubr.f32.gmra.mxu0 %v504
    %v599 = vpop.f32.mrf.mxu0
    %v600 = vadd.f32 %v498, %v599
    %v601 = vpop.f32.mrf.mxu0
    %602 = vmatprep.mubr.f32.mxu0 0.0
    %603 = vmatmul.mubr.f32.gmra.mxu0 %v507
    %v604 = vpop.f32.mrf.mxu0
    %v605 = vadd.f32 %v498, %v604
    %v606 = vpop.f32.mrf.mxu0
    %607 = vmatprep.mubr.f32.mxu0 0.0
    %608 = vmatmul.mubr.f32.gmra.mxu0 %v510
    %v609 = vpop.f32.mrf.mxu0
    %v610 = vadd.f32 %v498, %v609
    %v611 = vpop.f32.mrf.mxu0
    %612 = vmatprep.mubr.f32.mxu0 0.0
    %613 = vmatmul.mubr.f32.gmra.mxu0 %v513
    %v614 = vpop.f32.mrf.mxu0
    %v615 = vadd.f32 %v498, %v614
    %v616 = vpop.f32.mrf.mxu0
    %617 = vmatprep.mubr.f32.mxu0 0.0
    %618 = vmatmul.mubr.f32.gmra.mxu0 %v516
    %v619 = vpop.f32.mrf.mxu0
    %v620 = vadd.f32 %v498, %v619
    %v621 = vpop.f32.mrf.mxu0
    %622 = vmatprep.mubr.f32.mxu0 0.0
    %623 = vmatmul.mubr.f32.gmra.mxu0 %v519
    %v624 = vpop.f32.mrf.mxu0
    %v625 = vadd.f32 %v498, %v624
    %v626 = vpop.f32.mrf.mxu0
    %627 = vmatprep.mubr.f32.mxu0 0.0
    %628 = vmatmul.mubr.f32.gmra.mxu0 %v522
    %v629 = vpop.f32.mrf.mxu0
    %v630 = vadd.f32 %v498, %v629
    %v631 = vpop.f32.mrf.mxu0
    %632 = vdwg.mxu0
    %v633 = vlaneseq
    %v634 = vand.u32 %v633, 127
    %vm635 = vcmp.lt.s32.totalorder %v634, 16
    %v636 = vlaneseq
    %v637 = vshrl.u32 %v636, 7
    %v638 = vadd.s32 %v637, 8
    %v639 = vadd.s32 %v637, 16
    %v640 = vadd.s32 %v637, 24
    %v641 = vadd.s32 %v637, 32
    %v642 = vadd.s32 %v637, 40
    %v643 = vadd.s32 %v637, 48
    %v644 = vadd.s32 %v637, 56
    %vm645 = vcmp.lt.s32.totalorder %v637, 64
    %vm646 = vcmp.lt.s32.totalorder %v638, 64
    %vm647 = vcmp.lt.s32.totalorder %v639, 64
    %vm648 = vcmp.lt.s32.totalorder %v640, 64
    %vm649 = vcmp.lt.s32.totalorder %v641, 64
    %vm650 = vcmp.lt.s32.totalorder %v642, 64
    %vm651 = vcmp.lt.s32.totalorder %v643, 64
    %vm652 = vcmp.lt.s32.totalorder %v644, 64
    %vm653 = vmand %vm645, %vm635
    %vm654 = vmand %vm646, %vm635
    %vm655 = vmand %vm647, %vm635
    %vm656 = vmand %vm648, %vm635
    %vm657 = vmand %vm649, %vm635
    %vm658 = vmand %vm650, %vm635
    %vm659 = vmand %vm651, %vm635
    %vm660 = vmand %vm652, %vm635
    %v661 = vsel %vm653, %v595, inf
    %v662 = vsel %vm654, %v600, inf
    %v663 = vsel %vm655, %v605, inf
    %v664 = vsel %vm656, %v610, inf
    %v665 = vsel %vm657, %v615, inf
    %v666 = vsel %vm658, %v620, inf
    %v667 = vsel %vm659, %v625, inf
    %v668 = vsel %vm660, %v630, inf
    %v669 = vmin.f32 %v661, %v665
    %v670 = vmin.f32 %v662, %v666
    %v671 = vmin.f32 %v663, %v667
    %v672 = vmin.f32 %v664, %v668
    %v673 = vmin.f32 %v669, %v670
    %v674 = vmin.f32 %v671, %v672
    %v675 = vmin.f32 %v673, %v674
    %676 = vmin.xlane.f32.xlu0 %v675
    %v677 = vpop.xlane.xlu0 %676
    %v678 = vrot.slane %v677, 4
    %v679 = vmin.f32 %v677, %v678
    %v680 = vrot.slane %v679, 2
    %v681 = vmin.f32 %v679, %v680
    %v682 = vrot.slane %v681, 1
    %v683 = vmin.f32 %v681, %v682
    %s684 = vtos %v683
    %v685 = vsel %vm653, %v595, -inf
    %v686 = vsel %vm654, %v600, -inf
    %v687 = vsel %vm655, %v605, -inf
    %v688 = vsel %vm656, %v610, -inf
    %v689 = vsel %vm657, %v615, -inf
    %v690 = vsel %vm658, %v620, -inf
    %v691 = vsel %vm659, %v625, -inf
    %v692 = vsel %vm660, %v630, -inf
    %v693 = vmax.f32 %v685, %v689
    %v694 = vmax.f32 %v686, %v690
    %v695 = vmax.f32 %v687, %v691
    %v696 = vmax.f32 %v688, %v692
    %v697 = vmax.f32 %v693, %v694
    %v698 = vmax.f32 %v695, %v696
    %v699 = vmax.f32 %v697, %v698
    %700 = vmax.xlane.f32.xlu0 %v699
    %v701 = vpop.xlane.xlu0 %700
    %v702 = vrot.slane %v701, 4
    %v703 = vmax.f32 %v701, %v702
    %v704 = vrot.slane %v703, 2
    %v705 = vmax.f32 %v703, %v704
    %v706 = vrot.slane %v705, 1
    %v707 = vmax.f32 %v705, %v706
    %s708 = vtos %v707
    %s709 = ssub.f32 %s708, %s684
    %s710 = sadd.f32 %s709, 1e-12
    %v711 = vstv %s710
    %v712 = vrcp.pop %v711
    %s713 = vtos %v712
    %v714 = vstv %s684
    %v715 = vsub.f32 %v595, %v714
    %v716 = vsub.f32 %v600, %v714
    %v717 = vsub.f32 %v605, %v714
    %v718 = vsub.f32 %v610, %v714
    %v719 = vsub.f32 %v615, %v714
    %v720 = vsub.f32 %v620, %v714
    %v721 = vsub.f32 %v625, %v714
    %v722 = vsub.f32 %v630, %v714
    %v723 = vstv %s713
    %v724 = vmul.f32 %v715, %v723
    %v725 = vmul.f32 %v716, %v723
    %v726 = vmul.f32 %v717, %v723
    %v727 = vmul.f32 %v718, %v723
    %v728 = vmul.f32 %v719, %v723
    %v729 = vmul.f32 %v720, %v723
    %v730 = vmul.f32 %v721, %v723
    %v731 = vmul.f32 %v722, %v723
    %732 = vst [vmem:[%s9] sm:$0xff] %v724
    %733 = vst [vmem:[%s9 + $0x8] sm:$0xff] %v725
    %734 = vst [vmem:[%s9 + $0x10] sm:$0xff] %v726
    %735 = vst [vmem:[%s9 + $0x18] sm:$0xff] %v727
    %736 = vst [vmem:[%s9 + $0x20] sm:$0xff] %v728
    %737 = vst [vmem:[%s9 + $0x28] sm:$0xff] %v729
    %738 = vst [vmem:[%s9 + $0x30] sm:$0xff] %v730
    %739 = vst [vmem:[%s9 + $0x38] sm:$0xff] %v731
    %740 = vst [vmem:[#allocation3] sm:$0xff] %v714
    %v741 = vstv %s708
    %742 = vst [vmem:[#allocation5] sm:$0xff] %v741
    // Predicated region
    $region38: #{_edge_to_node_attention_impl.3} parent=1 // pred_check
      _
    $region39: #{_edge_to_node_attention_impl.3} parent=1 // pred_check_branch
      %744 = sbr.rel (0) target = $region41
    $region40: #{_edge_to_node_attention_impl.3} parent=1 // pred_region
      _
    $region41: #{_edge_to_node_attention_impl.3} parent=1 // pred_fallthru
      _
    // Predicated region
    $region42: #{_edge_to_node_attention_impl.3} parent=1 // pred_check
      _
    $region43: #{_edge_to_node_attention_impl.3} parent=1 // pred_check_branch
      %746 = sbr.rel (0) target = $region45
    $region44: #{_edge_to_node_attention_impl.3} parent=1 // pred_region
      %s748 = ssub.s32 128, 128
      %749 = vsyncadd [#allocation4], %s748
      %s751 = sshll.u32 [#allocation3], 4
      %s752 = int_to_ptr.vmem [resolvable:$true] %s751
      %754 = dma.vmem_to_hbm [thread:$0]  %s752, 128, %s10, [#allocation4]
    $region45: #{_edge_to_node_attention_impl.3} parent=1 // pred_fallthru
      _
    // Predicated region
    $region46: #{_edge_to_node_attention_impl.3} parent=1 // pred_check
      _
    $region47: #{_edge_to_node_attention_impl.3} parent=1 // pred_check_branch
      %756 = sbr.rel (0) target = $region49
    $region48: #{_edge_to_node_attention_impl.3} parent=1 // pred_region
      %s758 = ssub.s32 128, 128
      %759 = vsyncadd [#allocation6], %s758
      %s761 = sshll.u32 [#allocation5], 4
      %s762 = int_to_ptr.vmem [resolvable:$true] %s761
      %764 = dma.vmem_to_hbm [thread:$0]  %s762, 128, %s11, [#allocation6]
    $region49: #{_edge_to_node_attention_impl.3} parent=1 // pred_fallthru
      _
    // Predicated region
    $region50: #{_edge_to_node_attention_impl.3} parent=1 // pred_check
      _
    $region51: #{_edge_to_node_attention_impl.3} parent=1 // pred_check_branch
      %766 = sbr.rel (0) target = $region53
    $region52: #{_edge_to_node_attention_impl.3} parent=1 // pred_region
      _
    $region53: #{_edge_to_node_attention_impl.3} parent=1 // pred_fallthru
      _
    // Predicated region
    $region54: #{_edge_to_node_attention_impl.3} parent=1 // pred_check
      _
    $region55: #{_edge_to_node_attention_impl.3} parent=1 // pred_check_branch
      %768 = sbr.rel (0) target = $region57
    $region56: #{_edge_to_node_attention_impl.3} parent=1 // pred_region
      %769 = dma.done [#allocation4], 128
    $region57: #{_edge_to_node_attention_impl.3} parent=1 // pred_fallthru
      _
    // Predicated region
    $region58: #{_edge_to_node_attention_impl.3} parent=1 // pred_check
      _
    $region59: #{_edge_to_node_attention_impl.3} parent=1 // pred_check_branch
      %771 = sbr.rel (0) target = $region61
    $region60: #{_edge_to_node_attention_impl.3} parent=1 // pred_region
      %772 = dma.done [#allocation6], 128
    $region61: #{_edge_to_node_attention_impl.3} parent=1 // pred_fallthru
      _
    %773 = vsyncpa [#allocation4], 1
    %774 = vsyncpa [#allocation6], 1

</llo_original>
